<compile_context>
chip_gen: v5e
topology: v5e:2x2
jax: 0.10.0
libtpu: 0.0.40
codegen_flags: <defaults>
</compile_context>

<pallas_src>
import functools

import jax
import jax.numpy as jnp
from jax.experimental import pallas as pl
from jax.experimental.pallas import tpu as pltpu


def _round_up(x, m):
    return (x + m - 1) // m * m


def _mlp_kernel(xu_ref, xc_ref, w1u_ref, w1c_ref, b1_ref, w2_ref, b2_ref, o_ref):
    # Layer 1: split-concat matmul, f32 accumulation on the MXU.
    h = jnp.dot(xu_ref[...], w1u_ref[...], preferred_element_type=jnp.float32)
    h = h + jnp.dot(xc_ref[...], w1c_ref[...], preferred_element_type=jnp.float32)
    # tanh stays in f32 on the EUP (required on v5e: no bf16 VPU/EUP path there).
    h = jnp.tanh(h + b1_ref[...])
    # Layer 2 (last layer, no activation). Cast h to the weight dtype so the bf16
    # path feeds bf16 operands to the MXU while still accumulating in f32.
    y = jnp.dot(h.astype(w2_ref.dtype), w2_ref[...],
                preferred_element_type=jnp.float32) + b2_ref[...]
    o_ref[...] = y.astype(o_ref.dtype)


@functools.partial(jax.jit, static_argnames=("tile_b", "use_bf16"))
def mlp_forward(user_rep, cand_rep, w1, b1, w2, b2, *, tile_b=256, use_bf16=False):
    assert tile_b % 8 == 0, "tile_b must be a multiple of 8 (sublane alignment)"
    B, Du = user_rep.shape
    Dc = cand_rep.shape[1]
    H1 = w1.shape[1]
    H2 = w2.shape[1]
    out_dtype = user_rep.dtype

    # --- Split W1 (removes the concat HBM pass): x@W1 == xu@W1u + xc@W1c -------
    w1u = w1[:Du]
    w1c = w1[Du:]

    # --- Pad hidden widths to lane multiples (unmasked stores, dense MXU) ------
    H1p = _round_up(H1, 128)
    H2p = _round_up(H2, 128)
    w1u = jnp.pad(w1u, ((0, 0), (0, H1p - H1)))
    w1c = jnp.pad(w1c, ((0, 0), (0, H1p - H1)))
    b1p = jnp.pad(b1, ((0, 0), (0, H1p - H1)))
    w2p = jnp.pad(w2, ((0, H1p - H1), (0, H2p - H2)))
    b2p = jnp.pad(b2, ((0, 0), (0, H2p - H2)))

    # --- Pad batch to a multiple of the batch tile -----------------------------
    Bp = _round_up(B, tile_b)
    if Bp != B:
        user_rep = jnp.pad(user_rep, ((0, Bp - B), (0, 0)))
        cand_rep = jnp.pad(cand_rep, ((0, Bp - B), (0, 0)))

    # --- Optional bf16 MXU operands (f32 accumulate; biases stay f32) ----------
    cdt = jnp.bfloat16 if use_bf16 else out_dtype
    xu = user_rep.astype(cdt)
    xc = cand_rep.astype(cdt)
    w1u = w1u.astype(cdt)
    w1c = w1c.astype(cdt)
    w2p = w2p.astype(cdt)

    grid = (Bp // tile_b,)
    out_p = pl.pallas_call(
        _mlp_kernel,
        out_shape=jax.ShapeDtypeStruct((Bp, H2p), out_dtype),
        grid_spec=pltpu.PrefetchScalarGridSpec(
            num_scalar_prefetch=0,
            grid=grid,
            in_specs=[
                pl.BlockSpec((tile_b, Du), lambda i: (i, 0)),   # user tile
                pl.BlockSpec((tile_b, Dc), lambda i: (i, 0)),   # cand tile
                pl.BlockSpec((Du, H1p), lambda i: (0, 0)),      # W1_user (resident)
                pl.BlockSpec((Dc, H1p), lambda i: (0, 0)),      # W1_cand (resident)
                pl.BlockSpec((1, H1p), lambda i: (0, 0)),       # b1
                pl.BlockSpec((H1p, H2p), lambda i: (0, 0)),     # W2 (resident)
                pl.BlockSpec((1, H2p), lambda i: (0, 0)),       # b2
            ],
            out_specs=pl.BlockSpec((tile_b, H2p), lambda i: (i, 0)),
        ),
        compiler_params=pltpu.CompilerParams(
            dimension_semantics=("parallel",),   # shards batch steps across v7x TCs
        ),
    )(xu, xc, w1u, w1c, b1p, w2p, b2p)

    # Slice away batch + lane padding.
    return out_p[:B, :H2]


def init_params(key, d_in, hidden_units):
    """Deterministic PyTorch-Linear-style init: U(-1/sqrt(fan_in), 1/sqrt(fan_in))."""
    params = []
    dims = [d_in] + list(hidden_units)
    for i in range(len(hidden_units)):
        key, kw, kb = jax.random.split(key, 3)
        fan_in = dims[i]
        bound = 1.0 / jnp.sqrt(jnp.float32(fan_in))
        w = jax.random.uniform(kw, (dims[i], dims[i + 1]), jnp.float32, -bound, bound)
        b = jax.random.uniform(kb, (1, dims[i + 1]), jnp.float32, -bound, bound)
        params.append((w, b))
    return params


if __name__ == "__main__":
    # Small shapes consistent with the module: dim_user_rep=32, dim_cand_rep=32,
    # hidden_units=[200, 100], batch=8.
    dim_user_rep, dim_cand_rep = 32, 32
    hidden_units = [200, 100]
    B = 8

    key = jax.random.PRNGKey(0)
    k_u, k_c, k_p = jax.random.split(key, 3)
    user_rep = jax.random.normal(k_u, (B, dim_user_rep), jnp.float32)
    cand_rep = jax.random.normal(k_c, (B, dim_cand_rep), jnp.float32)

    (w1, b1), (w2, b2) = init_params(k_p, dim_user_rep + dim_cand_rep, hidden_units)

    # Reference in plain JAX (exact module semantics).
    x = jnp.concatenate([user_rep, cand_rep], axis=1)
    ref = jnp.tanh(x @ w1 + b1) @ w2 + b2

    # Full-precision path.
    out = mlp_forward(user_rep, cand_rep, w1, b1, w2, b2)
    out = jax.block_until_ready(out)
    assert out.shape == (B, hidden_units[-1])
    assert jnp.allclose(out, ref, atol=1e-4, rtol=1e-4)

    # bf16-operand / f32-accumulate path (v6e / v7x fast path); looser tolerance.
    out_bf16 = mlp_forward(user_rep, cand_rep, w1, b1, w2, b2, use_bf16=True)
    out_bf16 = jax.block_until_ready(out_bf16)
    assert out_bf16.shape == (B, hidden_units[-1])
    assert jnp.allclose(out_bf16, ref, atol=5e-2, rtol=5e-2)

    print("KERNEL_OK")
</pallas_src>

<mosaic_0001>
module attributes {stable_mosaic.version = 11 : i64} {
  func.func @_mlp_kernel(%arg0: i32, %arg1: memref<256x32xf32, #tpu.memory_space<vmem>>, %arg2: memref<256x32xf32, #tpu.memory_space<vmem>>, %arg3: memref<32x256xf32, #tpu.memory_space<vmem>>, %arg4: memref<32x256xf32, #tpu.memory_space<vmem>>, %arg5: memref<1x256xf32, #tpu.memory_space<vmem>>, %arg6: memref<256x128xf32, #tpu.memory_space<vmem>>, %arg7: memref<1x128xf32, #tpu.memory_space<vmem>>, %arg8: memref<256x128xf32, #tpu.memory_space<vmem>>) attributes {dimension_semantics = [#tpu.dimension_semantics<parallel>], iteration_bounds = array<i64: 1>, scalar_prefetch = 0 : i64, scratch_operands = 0 : i64, tpu.core_type = #tpu.core_type<tc>, window_params = [{transform_indices = @transform_0, window_bounds = array<i64: 256, 32>}, {transform_indices = @transform_1, window_bounds = array<i64: 256, 32>}, {pipeline_mode = #tpu.pipeline_mode<synchronous>, transform_indices = @transform_2, window_bounds = array<i64: 32, 256>}, {pipeline_mode = #tpu.pipeline_mode<synchronous>, transform_indices = @transform_3, window_bounds = array<i64: 32, 256>}, {pipeline_mode = #tpu.pipeline_mode<synchronous>, transform_indices = @transform_4, window_bounds = array<i64: 1, 256>}, {pipeline_mode = #tpu.pipeline_mode<synchronous>, transform_indices = @transform_5, window_bounds = array<i64: 256, 128>}, {pipeline_mode = #tpu.pipeline_mode<synchronous>, transform_indices = @transform_6, window_bounds = array<i64: 1, 128>}, {transform_indices = @transform_7, window_bounds = array<i64: 256, 128>}]} {
    %c0 = arith.constant 0 : index
    %c0_0 = arith.constant 0 : index
    %0 = vector.load %arg1[%c0, %c0_0] : memref<256x32xf32, #tpu.memory_space<vmem>>, vector<256x32xf32>
    %c0_1 = arith.constant 0 : index
    %c0_2 = arith.constant 0 : index
    %1 = vector.load %arg3[%c0_1, %c0_2] : memref<32x256xf32, #tpu.memory_space<vmem>>, vector<32x256xf32>
    %cst = arith.constant dense<0.000000e+00> : vector<256x256xf32>
    %2 = tpu.matmul %0, %1, %cst {dimension_numbers = #tpu.dot_dimension_numbers<[1], [0], [0], [1], [0, 0, 1, 1], [], []>} : vector<256x32xf32>, vector<32x256xf32>, vector<256x256xf32> -> vector<256x256xf32>
    %c0_3 = arith.constant 0 : index
    %c0_4 = arith.constant 0 : index
    %3 = vector.load %arg2[%c0_3, %c0_4] : memref<256x32xf32, #tpu.memory_space<vmem>>, vector<256x32xf32>
    %c0_5 = arith.constant 0 : index
    %c0_6 = arith.constant 0 : index
    %4 = vector.load %arg4[%c0_5, %c0_6] : memref<32x256xf32, #tpu.memory_space<vmem>>, vector<32x256xf32>
    %cst_7 = arith.constant dense<0.000000e+00> : vector<256x256xf32>
    %5 = tpu.matmul %3, %4, %cst_7 {dimension_numbers = #tpu.dot_dimension_numbers<[1], [0], [0], [1], [0, 0, 1, 1], [], []>} : vector<256x32xf32>, vector<32x256xf32>, vector<256x256xf32> -> vector<256x256xf32>
    %6 = arith.addf %2, %5 : vector<256x256xf32>
    %c0_8 = arith.constant 0 : index
    %c0_9 = arith.constant 0 : index
    %7 = vector.load %arg5[%c0_8, %c0_9] : memref<1x256xf32, #tpu.memory_space<vmem>>, vector<1x256xf32>
    %8 = vector.broadcast %7 : vector<1x256xf32> to vector<256x256xf32>
    %9 = arith.addf %6, %8 : vector<256x256xf32>
    %10 = math.tanh %9 : vector<256x256xf32>
    %c0_10 = arith.constant 0 : index
    %c0_11 = arith.constant 0 : index
    %11 = vector.load %arg6[%c0_10, %c0_11] : memref<256x128xf32, #tpu.memory_space<vmem>>, vector<256x128xf32>
    %cst_12 = arith.constant dense<0.000000e+00> : vector<256x128xf32>
    %12 = tpu.matmul %10, %11, %cst_12 {dimension_numbers = #tpu.dot_dimension_numbers<[1], [0], [0], [1], [0, 0, 1, 1], [], []>} : vector<256x256xf32>, vector<256x128xf32>, vector<256x128xf32> -> vector<256x128xf32>
    %c0_13 = arith.constant 0 : index
    %c0_14 = arith.constant 0 : index
    %13 = vector.load %arg7[%c0_13, %c0_14] : memref<1x128xf32, #tpu.memory_space<vmem>>, vector<1x128xf32>
    %14 = vector.broadcast %13 : vector<1x128xf32> to vector<256x128xf32>
    %15 = arith.addf %12, %14 : vector<256x128xf32>
    %c0_15 = arith.constant 0 : index
    %c0_16 = arith.constant 0 : index
    %16 = vector.load %arg8[%c0_15, %c0_16] : memref<256x128xf32, #tpu.memory_space<vmem>>, vector<256x128xf32>
    tpu.vector_store %arg8[%c0_15, %c0_16], %15 {strides = array<i32>} : memref<256x128xf32, #tpu.memory_space<vmem>>, vector<256x128xf32>,
    return
  }
  func.func @transform_0(%arg0: i32) -> (i32, i32) {
    %c0_i32 = arith.constant 0 : i32
    %c0_i32_0 = arith.constant 0 : i32
    return %arg0, %c0_i32 : i32, i32
  }
  func.func @transform_1(%arg0: i32) -> (i32, i32) {
    %c0_i32 = arith.constant 0 : i32
    %c0_i32_0 = arith.constant 0 : i32
    return %arg0, %c0_i32 : i32, i32
  }
  func.func @transform_2(%arg0: i32) -> (i32, i32) {
    %c0_i32 = arith.constant 0 : i32
    %c0_i32_0 = arith.constant 0 : i32
    %c0_i32_1 = arith.constant 0 : i32
    return %c0_i32, %c0_i32_0 : i32, i32
  }
  func.func @transform_3(%arg0: i32) -> (i32, i32) {
    %c0_i32 = arith.constant 0 : i32
    %c0_i32_0 = arith.constant 0 : i32
    %c0_i32_1 = arith.constant 0 : i32
    return %c0_i32, %c0_i32_0 : i32, i32
  }
  func.func @transform_4(%arg0: i32) -> (i32, i32) {
    %c0_i32 = arith.constant 0 : i32
    %c0_i32_0 = arith.constant 0 : i32
    %c0_i32_1 = arith.constant 0 : i32
    return %c0_i32, %c0_i32_0 : i32, i32
  }
  func.func @transform_5(%arg0: i32) -> (i32, i32) {
    %c0_i32 = arith.constant 0 : i32
    %c0_i32_0 = arith.constant 0 : i32
    %c0_i32_1 = arith.constant 0 : i32
    return %c0_i32, %c0_i32_0 : i32, i32
  }
  func.func @transform_6(%arg0: i32) -> (i32, i32) {
    %c0_i32 = arith.constant 0 : i32
    %c0_i32_0 = arith.constant 0 : i32
    %c0_i32_1 = arith.constant 0 : i32
    return %c0_i32, %c0_i32_0 : i32, i32
  }
  func.func @transform_7(%arg0: i32) -> (i32, i32) {
    %c0_i32 = arith.constant 0 : i32
    %c0_i32_0 = arith.constant 0 : i32
    return %arg0, %c0_i32 : i32, i32
  }
}

</mosaic_0001>

<llo_original>
// kernel: mlp_forward.1
$region0: #{mlp_forward.1}
  #allocation0 [shape = 'u32[]', space=smem, size = 0x4, offset = 0x4, fixed_abs, tag = 'smem constant byte address 0x4 - core index']
  #allocation1 [shape = 'u32[72,128]{1,0:T(1,128)}', space=vmem, size = 0x9000, scoped, tag = 'internal scratch']
  %s0 = inlined_call_operand.vmem [shape: f32[256,32], index: 0, kind: input, shape index: {}]
  %s1 = inlined_call_operand.vmem [shape: f32[256,32], index: 1, kind: input, shape index: {}]
  %s2 = inlined_call_operand.vmem [shape: f32[32,256], index: 2, kind: input, shape index: {}]
  %s3 = inlined_call_operand.vmem [shape: f32[32,256], index: 3, kind: input, shape index: {}]
  %s4 = inlined_call_operand.vmem [shape: f32[1,256], index: 4, kind: input, shape index: {}]
  %s5 = inlined_call_operand.vmem [shape: f32[256,128], index: 5, kind: input, shape index: {}]
  %s6 = inlined_call_operand.vmem [shape: f32[1,128], index: 6, kind: input, shape index: {}]
  %s7 = inlined_call_operand.vmem [shape: f32[256,128], index: 7, kind: output, shape index: {}]
  %s8 = sld [smem:[#allocation0]]
  $region38: #{mlp_forward.1} parent=0
    _
  %s10 = ssub.s32 1, %s8
  %s11 = scalar_select 0, %s10, %s8
  // Predicated region
  $region2: #{mlp_forward.1} parent=0 // pred_check
    _
  $region3: #{mlp_forward.1} parent=0 // pred_check_branch
    %13 = sbr.rel (0) target = $region5
  $region4: #{mlp_forward.1} parent=0 // pred_region
    _
  $region5: #{mlp_forward.1} parent=0 // pred_fallthru
    _
  // Predicated region
  $region6: #{mlp_forward.1} parent=0 // pred_check
    _
  $region7: #{mlp_forward.1} parent=0 // pred_check_branch
    %15 = sbr.rel (0) target = $region9
  $region8: #{mlp_forward.1} parent=0 // pred_region
    _
  $region9: #{mlp_forward.1} parent=0 // pred_fallthru
    _
  // Predicated region
  $region10: #{mlp_forward.1} parent=0 // pred_check
    _
  $region11: #{mlp_forward.1} parent=0 // pred_check_branch
    %17 = sbr.rel (0) target = $region13
  $region12: #{mlp_forward.1} parent=0 // pred_region
    _
  $region13: #{mlp_forward.1} parent=0 // pred_fallthru
    _
  // Predicated region
  $region14: #{mlp_forward.1} parent=0 // pred_check
    _
  $region15: #{mlp_forward.1} parent=0 // pred_check_branch
    %19 = sbr.rel (0) target = $region17
  $region16: #{mlp_forward.1} parent=0 // pred_region
    _
  $region17: #{mlp_forward.1} parent=0 // pred_fallthru
    _
  // Predicated region
  $region18: #{mlp_forward.1} parent=0 // pred_check
    _
  $region19: #{mlp_forward.1} parent=0 // pred_check_branch
    %21 = sbr.rel (0) target = $region21
  $region20: #{mlp_forward.1} parent=0 // pred_region
    _
  $region21: #{mlp_forward.1} parent=0 // pred_fallthru
    _
  // Predicated region
  $region22: #{mlp_forward.1} parent=0 // pred_check
    _
  $region23: #{mlp_forward.1} parent=0 // pred_check_branch
    %23 = sbr.rel (0) target = $region25
  $region24: #{mlp_forward.1} parent=0 // pred_region
    _
  $region25: #{mlp_forward.1} parent=0 // pred_fallthru
    _
  // Predicated region
  $region26: #{mlp_forward.1} parent=0 // pred_check
    _
  $region27: #{mlp_forward.1} parent=0 // pred_check_branch
    %25 = sbr.rel (0) target = $region29
  $region28: #{mlp_forward.1} parent=0 // pred_region
    _
  $region29: #{mlp_forward.1} parent=0 // pred_fallthru
    _
  %v26 = vld [vmem:[%s0] sm:$0xff]
  %v27 = vld [vmem:[%s0 + $0x8] sm:$0xff]
  %v28 = vld [vmem:[%s0 + $0x10] sm:$0xff]
  %v29 = vld [vmem:[%s0 + $0x18] sm:$0xff]
  %v30 = vld [vmem:[%s0 + $0x20] sm:$0xff]
  %v31 = vld [vmem:[%s0 + $0x28] sm:$0xff]
  %v32 = vld [vmem:[%s0 + $0x30] sm:$0xff]
  %v33 = vld [vmem:[%s0 + $0x38] sm:$0xff]
  %v34 = vld [vmem:[%s0 + $0x40] sm:$0xff]
  %v35 = vld [vmem:[%s0 + $0x48] sm:$0xff]
  %v36 = vld [vmem:[%s0 + $0x50] sm:$0xff]
  %v37 = vld [vmem:[%s0 + $0x58] sm:$0xff]
  %v38 = vld [vmem:[%s0 + $0x60] sm:$0xff]
  %v39 = vld [vmem:[%s0 + $0x68] sm:$0xff]
  %v40 = vld [vmem:[%s0 + $0x70] sm:$0xff]
  %v41 = vld [vmem:[%s0 + $0x78] sm:$0xff]
  %v42 = vld [vmem:[%s0 + $0x80] sm:$0xff]
  %v43 = vld [vmem:[%s0 + $0x88] sm:$0xff]
  %v44 = vld [vmem:[%s0 + $0x90] sm:$0xff]
  %v45 = vld [vmem:[%s0 + $0x98] sm:$0xff]
  %v46 = vld [vmem:[%s0 + $0xa0] sm:$0xff]
  %v47 = vld [vmem:[%s0 + $0xa8] sm:$0xff]
  %v48 = vld [vmem:[%s0 + $0xb0] sm:$0xff]
  %v49 = vld [vmem:[%s0 + $0xb8] sm:$0xff]
  %v50 = vld [vmem:[%s0 + $0xc0] sm:$0xff]
  %v51 = vld [vmem:[%s0 + $0xc8] sm:$0xff]
  %v52 = vld [vmem:[%s0 + $0xd0] sm:$0xff]
  %v53 = vld [vmem:[%s0 + $0xd8] sm:$0xff]
  %v54 = vld [vmem:[%s0 + $0xe0] sm:$0xff]
  %v55 = vld [vmem:[%s0 + $0xe8] sm:$0xff]
  %v56 = vld [vmem:[%s0 + $0xf0] sm:$0xff]
  %v57 = vld [vmem:[%s0 + $0xf8] sm:$0xff]
  %v58 = vld [vmem:[%s2] sm:$0xff]
  %v59 = vld [vmem:[%s2 + $0x8] sm:$0xff]
  %v60 = vld [vmem:[%s2 + $0x10] sm:$0xff]
  %v61 = vld [vmem:[%s2 + $0x18] sm:$0xff]
  %v62 = vld [vmem:[%s2 + $0x20] sm:$0xff]
  %v63 = vld [vmem:[%s2 + $0x28] sm:$0xff]
  %v64 = vld [vmem:[%s2 + $0x30] sm:$0xff]
  %v65 = vld [vmem:[%s2 + $0x38] sm:$0xff]
  %v66 = vld [vmem:[%s1] sm:$0xff]
  %v67 = vld [vmem:[%s1 + $0x8] sm:$0xff]
  %v68 = vld [vmem:[%s1 + $0x10] sm:$0xff]
  %v69 = vld [vmem:[%s1 + $0x18] sm:$0xff]
  %v70 = vld [vmem:[%s1 + $0x20] sm:$0xff]
  %v71 = vld [vmem:[%s1 + $0x28] sm:$0xff]
  %v72 = vld [vmem:[%s1 + $0x30] sm:$0xff]
  %v73 = vld [vmem:[%s1 + $0x38] sm:$0xff]
  %v74 = vld [vmem:[%s1 + $0x40] sm:$0xff]
  %v75 = vld [vmem:[%s1 + $0x48] sm:$0xff]
  %v76 = vld [vmem:[%s1 + $0x50] sm:$0xff]
  %v77 = vld [vmem:[%s1 + $0x58] sm:$0xff]
  %v78 = vld [vmem:[%s1 + $0x60] sm:$0xff]
  %v79 = vld [vmem:[%s1 + $0x68] sm:$0xff]
  %v80 = vld [vmem:[%s1 + $0x70] sm:$0xff]
  %v81 = vld [vmem:[%s1 + $0x78] sm:$0xff]
  %v82 = vld [vmem:[%s1 + $0x80] sm:$0xff]
  %v83 = vld [vmem:[%s1 + $0x88] sm:$0xff]
  %v84 = vld [vmem:[%s1 + $0x90] sm:$0xff]
  %v85 = vld [vmem:[%s1 + $0x98] sm:$0xff]
  %v86 = vld [vmem:[%s1 + $0xa0] sm:$0xff]
  %v87 = vld [vmem:[%s1 + $0xa8] sm:$0xff]
  %v88 = vld [vmem:[%s1 + $0xb0] sm:$0xff]
  %v89 = vld [vmem:[%s1 + $0xb8] sm:$0xff]
  %v90 = vld [vmem:[%s1 + $0xc0] sm:$0xff]
  %v91 = vld [vmem:[%s1 + $0xc8] sm:$0xff]
  %v92 = vld [vmem:[%s1 + $0xd0] sm:$0xff]
  %v93 = vld [vmem:[%s1 + $0xd8] sm:$0xff]
  %v94 = vld [vmem:[%s1 + $0xe0] sm:$0xff]
  %v95 = vld [vmem:[%s1 + $0xe8] sm:$0xff]
  %v96 = vld [vmem:[%s1 + $0xf0] sm:$0xff]
  %v97 = vld [vmem:[%s1 + $0xf8] sm:$0xff]
  %v98 = vld [vmem:[%s3] sm:$0xff]
  %v99 = vld [vmem:[%s3 + $0x8] sm:$0xff]
  %v100 = vld [vmem:[%s3 + $0x10] sm:$0xff]
  %v101 = vld [vmem:[%s3 + $0x18] sm:$0xff]
  %v102 = vld [vmem:[%s3 + $0x20] sm:$0xff]
  %v103 = vld [vmem:[%s3 + $0x28] sm:$0xff]
  %v104 = vld [vmem:[%s3 + $0x30] sm:$0xff]
  %v105 = vld [vmem:[%s3 + $0x38] sm:$0xff]
  %vm106 = vcmask 261120
  %v108 = vsel %vm106, %v66, 0
  %v111 = vsel %vm106, %v67, 0
  %v114 = vsel %vm106, %v68, 0
  %v117 = vsel %vm106, %v69, 0
  %v120 = vsel %vm106, %v70, 0
  %v123 = vsel %vm106, %v71, 0
  %v126 = vsel %vm106, %v72, 0
  %v129 = vsel %vm106, %v73, 0
  %v132 = vsel %vm106, %v74, 0
  %v135 = vsel %vm106, %v75, 0
  %v138 = vsel %vm106, %v76, 0
  %v141 = vsel %vm106, %v77, 0
  %v144 = vsel %vm106, %v78, 0
  %v147 = vsel %vm106, %v79, 0
  %v150 = vsel %vm106, %v80, 0
  %v153 = vsel %vm106, %v81, 0
  %v156 = vsel %vm106, %v82, 0
  %v159 = vsel %vm106, %v83, 0
  %v162 = vsel %vm106, %v84, 0
  %v165 = vsel %vm106, %v85, 0
  %v168 = vsel %vm106, %v86, 0
  %v171 = vsel %vm106, %v87, 0
  %v174 = vsel %vm106, %v88, 0
  %v177 = vsel %vm106, %v89, 0
  %v180 = vsel %vm106, %v90, 0
  %v183 = vsel %vm106, %v91, 0
  %v186 = vsel %vm106, %v92, 0
  %v189 = vsel %vm106, %v93, 0
  %v192 = vsel %vm106, %v94, 0
  %v195 = vsel %vm106, %v95, 0
  %v198 = vsel %vm106, %v96, 0
  %v201 = vsel %vm106, %v97, 0
  %203 = vmatpush.msra.mxu0 0.0
  %204 = vmatpush.msra.mxu0 0.0
  %205 = vmatpush.msra.mxu0 0.0
  %206 = vmatpush.msra.mxu0 0.0
  %207 = vmatpush.msra.mxu0 0.0
  %208 = vmatpush.msra.mxu0 0.0
  %209 = vmatpush.msra.mxu0 0.0
  %210 = vmatpush.msra.mxu0 0.0
  %211 = vmatpush.msra.mxu0 0.0
  %212 = vmatpush.msra.mxu0 0.0
  %213 = vmatpush.msra.mxu0 0.0
  %214 = vmatpush.msra.mxu0 0.0
  %215 = vmatpush.msra.mxu0 %v104
  %216 = vmatpush.msra.mxu0 %v102
  %217 = vmatpush.msra.mxu0 %v100
  %218 = vmatpush.msra.mxu0 %v98
  %219 = vmatmul.f32.gmra.mxu0 %v108
  %v220 = vpop.f32.mrf.mxu0
  %v221 = vadd.f32 0.0, %v220
  %222 = vmatmul.f32.gmra.mxu0 %v111
  %v223 = vpop.f32.mrf.mxu0
  %v224 = vadd.f32 0.0, %v223
  %225 = vmatmul.f32.gmra.mxu0 %v114
  %v226 = vpop.f32.mrf.mxu0
  %v227 = vadd.f32 0.0, %v226
  %228 = vmatmul.f32.gmra.mxu0 %v117
  %v229 = vpop.f32.mrf.mxu0
  %v230 = vadd.f32 0.0, %v229
  %231 = vmatmul.f32.gmra.mxu0 %v120
  %v232 = vpop.f32.mrf.mxu0
  %v233 = vadd.f32 0.0, %v232
  %234 = vmatmul.f32.gmra.mxu0 %v123
  %v235 = vpop.f32.mrf.mxu0
  %v236 = vadd.f32 0.0, %v235
  %237 = vmatmul.f32.gmra.mxu0 %v126
  %v238 = vpop.f32.mrf.mxu0
  %v239 = vadd.f32 0.0, %v238
  %240 = vmatmul.f32.gmra.mxu0 %v129
  %v241 = vpop.f32.mrf.mxu0
  %v242 = vadd.f32 0.0, %v241
  %243 = vmatmul.f32.gmra.mxu0 %v132
  %v244 = vpop.f32.mrf.mxu0
  %v245 = vadd.f32 0.0, %v244
  %246 = vmatmul.f32.gmra.mxu0 %v135
  %v247 = vpop.f32.mrf.mxu0
  %v248 = vadd.f32 0.0, %v247
  %249 = vmatmul.f32.gmra.mxu0 %v138
  %v250 = vpop.f32.mrf.mxu0
  %v251 = vadd.f32 0.0, %v250
  %252 = vmatmul.f32.gmra.mxu0 %v141
  %v253 = vpop.f32.mrf.mxu0
  %v254 = vadd.f32 0.0, %v253
  %255 = vmatmul.f32.gmra.mxu0 %v144
  %v256 = vpop.f32.mrf.mxu0
  %v257 = vadd.f32 0.0, %v256
  %258 = vmatmul.f32.gmra.mxu0 %v147
  %v259 = vpop.f32.mrf.mxu0
  %v260 = vadd.f32 0.0, %v259
  %261 = vmatmul.f32.gmra.mxu0 %v150
  %v262 = vpop.f32.mrf.mxu0
  %v263 = vadd.f32 0.0, %v262
  %264 = vmatmul.f32.gmra.mxu0 %v153
  %v265 = vpop.f32.mrf.mxu0
  %v266 = vadd.f32 0.0, %v265
  %267 = vmatmul.f32.gmra.mxu0 %v156
  %v268 = vpop.f32.mrf.mxu0
  %v269 = vadd.f32 0.0, %v268
  %270 = vmatmul.f32.gmra.mxu0 %v159
  %v271 = vpop.f32.mrf.mxu0
  %v272 = vadd.f32 0.0, %v271
  %273 = vmatmul.f32.gmra.mxu0 %v162
  %v274 = vpop.f32.mrf.mxu0
  %v275 = vadd.f32 0.0, %v274
  %276 = vmatmul.f32.gmra.mxu0 %v165
  %v277 = vpop.f32.mrf.mxu0
  %v278 = vadd.f32 0.0, %v277
  %279 = vmatmul.f32.gmra.mxu0 %v168
  %v280 = vpop.f32.mrf.mxu0
  %v281 = vadd.f32 0.0, %v280
  %282 = vmatmul.f32.gmra.mxu0 %v171
  %v283 = vpop.f32.mrf.mxu0
  %v284 = vadd.f32 0.0, %v283
  %285 = vmatmul.f32.gmra.mxu0 %v174
  %v286 = vpop.f32.mrf.mxu0
  %v287 = vadd.f32 0.0, %v286
  %288 = vmatmul.f32.gmra.mxu0 %v177
  %v289 = vpop.f32.mrf.mxu0
  %v290 = vadd.f32 0.0, %v289
  %291 = vmatmul.f32.gmra.mxu0 %v180
  %v292 = vpop.f32.mrf.mxu0
  %v293 = vadd.f32 0.0, %v292
  %294 = vmatmul.f32.gmra.mxu0 %v183
  %v295 = vpop.f32.mrf.mxu0
  %v296 = vadd.f32 0.0, %v295
  %297 = vmatmul.f32.gmra.mxu0 %v186
  %v298 = vpop.f32.mrf.mxu0
  %v299 = vadd.f32 0.0, %v298
  %300 = vmatmul.f32.gmra.mxu0 %v189
  %v301 = vpop.f32.mrf.mxu0
  %v302 = vadd.f32 0.0, %v301
  %303 = vmatmul.f32.gmra.mxu0 %v192
  %v304 = vpop.f32.mrf.mxu0
  %v305 = vadd.f32 0.0, %v304
  %306 = vmatmul.f32.gmra.mxu0 %v195
  %v307 = vpop.f32.mrf.mxu0
  %v308 = vadd.f32 0.0, %v307
  %309 = vmatmul.f32.gmra.mxu0 %v198
  %v310 = vpop.f32.mrf.mxu0
  %v311 = vadd.f32 0.0, %v310
  %312 = vmatmul.f32.gmra.mxu0 %v201
  %v313 = vpop.f32.mrf.mxu0
  %v314 = vadd.f32 0.0, %v313
  %315 = vdwg.mxu0
  %316 = vmatpush.msra.mxu0 0.0
  %317 = vmatpush.msra.mxu0 0.0
  %318 = vmatpush.msra.mxu0 0.0
  %319 = vmatpush.msra.mxu0 0.0
  %320 = vmatpush.msra.mxu0 0.0
  %321 = vmatpush.msra.mxu0 0.0
  %322 = vmatpush.msra.mxu0 0.0
  %323 = vmatpush.msra.mxu0 0.0
  %324 = vmatpush.msra.mxu0 0.0
  %325 = vmatpush.msra.mxu0 0.0
  %326 = vmatpush.msra.mxu0 0.0
  %327 = vmatpush.msra.mxu0 0.0
  %328 = vmatpush.msra.mxu0 %v105
  %329 = vmatpush.msra.mxu0 %v103
  %330 = vmatpush.msra.mxu0 %v101
  %331 = vmatpush.msra.mxu0 %v99
  %332 = vmatmul.f32.gmra.mxu0 %v108
  %v333 = vpop.f32.mrf.mxu0
  %v334 = vadd.f32 0.0, %v333
  %335 = vmatmul.f32.gmra.mxu0 %v111
  %v336 = vpop.f32.mrf.mxu0
  %v337 = vadd.f32 0.0, %v336
  %338 = vmatmul.f32.gmra.mxu0 %v114
  %v339 = vpop.f32.mrf.mxu0
  %v340 = vadd.f32 0.0, %v339
  %341 = vmatmul.f32.gmra.mxu0 %v117
  %v342 = vpop.f32.mrf.mxu0
  %v343 = vadd.f32 0.0, %v342
  %344 = vmatmul.f32.gmra.mxu0 %v120
  %v345 = vpop.f32.mrf.mxu0
  %v346 = vadd.f32 0.0, %v345
  %347 = vmatmul.f32.gmra.mxu0 %v123
  %v348 = vpop.f32.mrf.mxu0
  %v349 = vadd.f32 0.0, %v348
  %350 = vmatmul.f32.gmra.mxu0 %v126
  %v351 = vpop.f32.mrf.mxu0
  %v352 = vadd.f32 0.0, %v351
  %353 = vmatmul.f32.gmra.mxu0 %v129
  %v354 = vpop.f32.mrf.mxu0
  %v355 = vadd.f32 0.0, %v354
  %356 = vmatmul.f32.gmra.mxu0 %v132
  %v357 = vpop.f32.mrf.mxu0
  %v358 = vadd.f32 0.0, %v357
  %359 = vmatmul.f32.gmra.mxu0 %v135
  %v360 = vpop.f32.mrf.mxu0
  %v361 = vadd.f32 0.0, %v360
  %362 = vmatmul.f32.gmra.mxu0 %v138
  %v363 = vpop.f32.mrf.mxu0
  %v364 = vadd.f32 0.0, %v363
  %365 = vmatmul.f32.gmra.mxu0 %v141
  %v366 = vpop.f32.mrf.mxu0
  %v367 = vadd.f32 0.0, %v366
  %368 = vmatmul.f32.gmra.mxu0 %v144
  %v369 = vpop.f32.mrf.mxu0
  %v370 = vadd.f32 0.0, %v369
  %371 = vmatmul.f32.gmra.mxu0 %v147
  %v372 = vpop.f32.mrf.mxu0
  %v373 = vadd.f32 0.0, %v372
  %374 = vmatmul.f32.gmra.mxu0 %v150
  %v375 = vpop.f32.mrf.mxu0
  %v376 = vadd.f32 0.0, %v375
  %377 = vmatmul.f32.gmra.mxu0 %v153
  %v378 = vpop.f32.mrf.mxu0
  %v379 = vadd.f32 0.0, %v378
  %380 = vmatmul.f32.gmra.mxu0 %v156
  %v381 = vpop.f32.mrf.mxu0
  %v382 = vadd.f32 0.0, %v381
  %383 = vmatmul.f32.gmra.mxu0 %v159
  %v384 = vpop.f32.mrf.mxu0
  %v385 = vadd.f32 0.0, %v384
  %386 = vmatmul.f32.gmra.mxu0 %v162
  %v387 = vpop.f32.mrf.mxu0
  %v388 = vadd.f32 0.0, %v387
  %389 = vmatmul.f32.gmra.mxu0 %v165
  %v390 = vpop.f32.mrf.mxu0
  %v391 = vadd.f32 0.0, %v390
  %392 = vmatmul.f32.gmra.mxu0 %v168
  %v393 = vpop.f32.mrf.mxu0
  %v394 = vadd.f32 0.0, %v393
  %395 = vmatmul.f32.gmra.mxu0 %v171
  %v396 = vpop.f32.mrf.mxu0
  %v397 = vadd.f32 0.0, %v396
  %398 = vmatmul.f32.gmra.mxu0 %v174
  %v399 = vpop.f32.mrf.mxu0
  %v400 = vadd.f32 0.0, %v399
  %401 = vmatmul.f32.gmra.mxu0 %v177
  %v402 = vpop.f32.mrf.mxu0
  %v403 = vadd.f32 0.0, %v402
  %404 = vmatmul.f32.gmra.mxu0 %v180
  %v405 = vpop.f32.mrf.mxu0
  %v406 = vadd.f32 0.0, %v405
  %407 = vmatmul.f32.gmra.mxu0 %v183
  %v408 = vpop.f32.mrf.mxu0
  %v409 = vadd.f32 0.0, %v408
  %410 = vmatmul.f32.gmra.mxu0 %v186
  %v411 = vpop.f32.mrf.mxu0
  %v412 = vadd.f32 0.0, %v411
  %413 = vmatmul.f32.gmra.mxu0 %v189
  %v414 = vpop.f32.mrf.mxu0
  %v415 = vadd.f32 0.0, %v414
  %416 = vmatmul.f32.gmra.mxu0 %v192
  %v417 = vpop.f32.mrf.mxu0
  %v418 = vadd.f32 0.0, %v417
  %419 = vmatmul.f32.gmra.mxu0 %v195
  %v420 = vpop.f32.mrf.mxu0
  %v421 = vadd.f32 0.0, %v420
  %422 = vmatmul.f32.gmra.mxu0 %v198
  %v423 = vpop.f32.mrf.mxu0
  %v424 = vadd.f32 0.0, %v423
  %425 = vmatmul.f32.gmra.mxu0 %v201
  %v426 = vpop.f32.mrf.mxu0
  %v427 = vadd.f32 0.0, %v426
  %428 = vdwg.mxu0
  %v430 = vsel %vm106, %v26, 0
  %v433 = vsel %vm106, %v27, 0
  %v436 = vsel %vm106, %v28, 0
  %v439 = vsel %vm106, %v29, 0
  %v442 = vsel %vm106, %v30, 0
  %v445 = vsel %vm106, %v31, 0
  %v448 = vsel %vm106, %v32, 0
  %v451 = vsel %vm106, %v33, 0
  %v454 = vsel %vm106, %v34, 0
  %v457 = vsel %vm106, %v35, 0
  %v460 = vsel %vm106, %v36, 0
  %v463 = vsel %vm106, %v37, 0
  %v466 = vsel %vm106, %v38, 0
  %v469 = vsel %vm106, %v39, 0
  %v472 = vsel %vm106, %v40, 0
  %v475 = vsel %vm106, %v41, 0
  %v478 = vsel %vm106, %v42, 0
  %v481 = vsel %vm106, %v43, 0
  %v484 = vsel %vm106, %v44, 0
  %v487 = vsel %vm106, %v45, 0
  %v490 = vsel %vm106, %v46, 0
  %v493 = vsel %vm106, %v47, 0
  %v496 = vsel %vm106, %v48, 0
  %v499 = vsel %vm106, %v49, 0
  %v502 = vsel %vm106, %v50, 0
  %v505 = vsel %vm106, %v51, 0
  %v508 = vsel %vm106, %v52, 0
  %v511 = vsel %vm106, %v53, 0
  %v514 = vsel %vm106, %v54, 0
  %v517 = vsel %vm106, %v55, 0
  %v520 = vsel %vm106, %v56, 0
  %v523 = vsel %vm106, %v57, 0
  %525 = vmatpush.msra.mxu0 0.0
  %526 = vmatpush.msra.mxu0 0.0
  %527 = vmatpush.msra.mxu0 0.0
  %528 = vmatpush.msra.mxu0 0.0
  %529 = vmatpush.msra.mxu0 0.0
  %530 = vmatpush.msra.mxu0 0.0
  %531 = vmatpush.msra.mxu0 0.0
  %532 = vmatpush.msra.mxu0 0.0
  %533 = vmatpush.msra.mxu0 0.0
  %534 = vmatpush.msra.mxu0 0.0
  %535 = vmatpush.msra.mxu0 0.0
  %536 = vmatpush.msra.mxu0 0.0
  %537 = vmatpush.msra.mxu0 %v64
  %538 = vmatpush.msra.mxu0 %v62
  %539 = vmatpush.msra.mxu0 %v60
  %540 = vmatpush.msra.mxu0 %v58
  %541 = vmatmul.f32.gmra.mxu0 %v430
  %v542 = vpop.f32.mrf.mxu0
  %v543 = vadd.f32 %v221, %v542
  %544 = vmatmul.f32.gmra.mxu0 %v433
  %v545 = vpop.f32.mrf.mxu0
  %v546 = vadd.f32 %v224, %v545
  %547 = vmatmul.f32.gmra.mxu0 %v436
  %v548 = vpop.f32.mrf.mxu0
  %v549 = vadd.f32 %v227, %v548
  %550 = vmatmul.f32.gmra.mxu0 %v439
  %v551 = vpop.f32.mrf.mxu0
  %v552 = vadd.f32 %v230, %v551
  %553 = vmatmul.f32.gmra.mxu0 %v442
  %v554 = vpop.f32.mrf.mxu0
  %v555 = vadd.f32 %v233, %v554
  %556 = vmatmul.f32.gmra.mxu0 %v445
  %v557 = vpop.f32.mrf.mxu0
  %v558 = vadd.f32 %v236, %v557
  %559 = vmatmul.f32.gmra.mxu0 %v448
  %v560 = vpop.f32.mrf.mxu0
  %v561 = vadd.f32 %v239, %v560
  %562 = vmatmul.f32.gmra.mxu0 %v451
  %v563 = vpop.f32.mrf.mxu0
  %v564 = vadd.f32 %v242, %v563
  %565 = vmatmul.f32.gmra.mxu0 %v454
  %v566 = vpop.f32.mrf.mxu0
  %v567 = vadd.f32 %v245, %v566
  %568 = vmatmul.f32.gmra.mxu0 %v457
  %v569 = vpop.f32.mrf.mxu0
  %v570 = vadd.f32 %v248, %v569
  %571 = vmatmul.f32.gmra.mxu0 %v460
  %v572 = vpop.f32.mrf.mxu0
  %v573 = vadd.f32 %v251, %v572
  %574 = vmatmul.f32.gmra.mxu0 %v463
  %v575 = vpop.f32.mrf.mxu0
  %v576 = vadd.f32 %v254, %v575
  %577 = vmatmul.f32.gmra.mxu0 %v466
  %v578 = vpop.f32.mrf.mxu0
  %v579 = vadd.f32 %v257, %v578
  %580 = vmatmul.f32.gmra.mxu0 %v469
  %v581 = vpop.f32.mrf.mxu0
  %v582 = vadd.f32 %v260, %v581
  %583 = vmatmul.f32.gmra.mxu0 %v472
  %v584 = vpop.f32.mrf.mxu0
  %v585 = vadd.f32 %v263, %v584
  %586 = vmatmul.f32.gmra.mxu0 %v475
  %v587 = vpop.f32.mrf.mxu0
  %v588 = vadd.f32 %v266, %v587
  %589 = vmatmul.f32.gmra.mxu0 %v478
  %v590 = vpop.f32.mrf.mxu0
  %v591 = vadd.f32 %v269, %v590
  %592 = vmatmul.f32.gmra.mxu0 %v481
  %v593 = vpop.f32.mrf.mxu0
  %v594 = vadd.f32 %v272, %v593
  %595 = vmatmul.f32.gmra.mxu0 %v484
  %v596 = vpop.f32.mrf.mxu0
  %v597 = vadd.f32 %v275, %v596
  %598 = vmatmul.f32.gmra.mxu0 %v487
  %v599 = vpop.f32.mrf.mxu0
  %v600 = vadd.f32 %v278, %v599
  %601 = vmatmul.f32.gmra.mxu0 %v490
  %v602 = vpop.f32.mrf.mxu0
  %v603 = vadd.f32 %v281, %v602
  %604 = vmatmul.f32.gmra.mxu0 %v493
  %v605 = vpop.f32.mrf.mxu0
  %v606 = vadd.f32 %v284, %v605
  %607 = vmatmul.f32.gmra.mxu0 %v496
  %v608 = vpop.f32.mrf.mxu0
  %v609 = vadd.f32 %v287, %v608
  %610 = vmatmul.f32.gmra.mxu0 %v499
  %v611 = vpop.f32.mrf.mxu0
  %v612 = vadd.f32 %v290, %v611
  %613 = vmatmul.f32.gmra.mxu0 %v502
  %v614 = vpop.f32.mrf.mxu0
  %v615 = vadd.f32 %v293, %v614
  %616 = vmatmul.f32.gmra.mxu0 %v505
  %v617 = vpop.f32.mrf.mxu0
  %v618 = vadd.f32 %v296, %v617
  %619 = vmatmul.f32.gmra.mxu0 %v508
  %v620 = vpop.f32.mrf.mxu0
  %v621 = vadd.f32 %v299, %v620
  %622 = vmatmul.f32.gmra.mxu0 %v511
  %v623 = vpop.f32.mrf.mxu0
  %v624 = vadd.f32 %v302, %v623
  %625 = vmatmul.f32.gmra.mxu0 %v514
  %v626 = vpop.f32.mrf.mxu0
  %v627 = vadd.f32 %v305, %v626
  %628 = vmatmul.f32.gmra.mxu0 %v517
  %v629 = vpop.f32.mrf.mxu0
  %v630 = vadd.f32 %v308, %v629
  %631 = vmatmul.f32.gmra.mxu0 %v520
  %v632 = vpop.f32.mrf.mxu0
  %v633 = vadd.f32 %v311, %v632
  %634 = vmatmul.f32.gmra.mxu0 %v523
  %v635 = vpop.f32.mrf.mxu0
  %v636 = vadd.f32 %v314, %v635
  %637 = vdwg.mxu0
  %638 = vmatpush.msra.mxu0 0.0
  %639 = vmatpush.msra.mxu0 0.0
  %640 = vmatpush.msra.mxu0 0.0
  %641 = vmatpush.msra.mxu0 0.0
  %642 = vmatpush.msra.mxu0 0.0
  %643 = vmatpush.msra.mxu0 0.0
  %644 = vmatpush.msra.mxu0 0.0
  %645 = vmatpush.msra.mxu0 0.0
  %646 = vmatpush.msra.mxu0 0.0
  %647 = vmatpush.msra.mxu0 0.0
  %648 = vmatpush.msra.mxu0 0.0
  %649 = vmatpush.msra.mxu0 0.0
  %650 = vmatpush.msra.mxu0 %v65
  %651 = vmatpush.msra.mxu0 %v63
  %652 = vmatpush.msra.mxu0 %v61
  %653 = vmatpush.msra.mxu0 %v59
  %654 = vmatmul.f32.gmra.mxu0 %v430
  %v655 = vpop.f32.mrf.mxu0
  %v656 = vadd.f32 %v334, %v655
  %657 = vmatmul.f32.gmra.mxu0 %v433
  %v658 = vpop.f32.mrf.mxu0
  %v659 = vadd.f32 %v337, %v658
  %660 = vmatmul.f32.gmra.mxu0 %v436
  %v661 = vpop.f32.mrf.mxu0
  %v662 = vadd.f32 %v340, %v661
  %663 = vmatmul.f32.gmra.mxu0 %v439
  %v664 = vpop.f32.mrf.mxu0
  %v665 = vadd.f32 %v343, %v664
  %666 = vmatmul.f32.gmra.mxu0 %v442
  %v667 = vpop.f32.mrf.mxu0
  %v668 = vadd.f32 %v346, %v667
  %669 = vmatmul.f32.gmra.mxu0 %v445
  %v670 = vpop.f32.mrf.mxu0
  %v671 = vadd.f32 %v349, %v670
  %672 = vmatmul.f32.gmra.mxu0 %v448
  %v673 = vpop.f32.mrf.mxu0
  %v674 = vadd.f32 %v352, %v673
  %675 = vmatmul.f32.gmra.mxu0 %v451
  %v676 = vpop.f32.mrf.mxu0
  %v677 = vadd.f32 %v355, %v676
  %678 = vmatmul.f32.gmra.mxu0 %v454
  %v679 = vpop.f32.mrf.mxu0
  %v680 = vadd.f32 %v358, %v679
  %681 = vmatmul.f32.gmra.mxu0 %v457
  %v682 = vpop.f32.mrf.mxu0
  %v683 = vadd.f32 %v361, %v682
  %684 = vmatmul.f32.gmra.mxu0 %v460
  %v685 = vpop.f32.mrf.mxu0
  %v686 = vadd.f32 %v364, %v685
  %687 = vmatmul.f32.gmra.mxu0 %v463
  %v688 = vpop.f32.mrf.mxu0
  %v689 = vadd.f32 %v367, %v688
  %690 = vmatmul.f32.gmra.mxu0 %v466
  %v691 = vpop.f32.mrf.mxu0
  %v692 = vadd.f32 %v370, %v691
  %693 = vmatmul.f32.gmra.mxu0 %v469
  %v694 = vpop.f32.mrf.mxu0
  %v695 = vadd.f32 %v373, %v694
  %696 = vmatmul.f32.gmra.mxu0 %v472
  %v697 = vpop.f32.mrf.mxu0
  %v698 = vadd.f32 %v376, %v697
  %699 = vmatmul.f32.gmra.mxu0 %v475
  %v700 = vpop.f32.mrf.mxu0
  %v701 = vadd.f32 %v379, %v700
  %702 = vmatmul.f32.gmra.mxu0 %v478
  %v703 = vpop.f32.mrf.mxu0
  %v704 = vadd.f32 %v382, %v703
  %705 = vmatmul.f32.gmra.mxu0 %v481
  %v706 = vpop.f32.mrf.mxu0
  %v707 = vadd.f32 %v385, %v706
  %708 = vmatmul.f32.gmra.mxu0 %v484
  %v709 = vpop.f32.mrf.mxu0
  %v710 = vadd.f32 %v388, %v709
  %711 = vmatmul.f32.gmra.mxu0 %v487
  %v712 = vpop.f32.mrf.mxu0
  %v713 = vadd.f32 %v391, %v712
  %714 = vmatmul.f32.gmra.mxu0 %v490
  %v715 = vpop.f32.mrf.mxu0
  %v716 = vadd.f32 %v394, %v715
  %717 = vmatmul.f32.gmra.mxu0 %v493
  %v718 = vpop.f32.mrf.mxu0
  %v719 = vadd.f32 %v397, %v718
  %720 = vmatmul.f32.gmra.mxu0 %v496
  %v721 = vpop.f32.mrf.mxu0
  %v722 = vadd.f32 %v400, %v721
  %723 = vmatmul.f32.gmra.mxu0 %v499
  %v724 = vpop.f32.mrf.mxu0
  %v725 = vadd.f32 %v403, %v724
  %726 = vmatmul.f32.gmra.mxu0 %v502
  %v727 = vpop.f32.mrf.mxu0
  %v728 = vadd.f32 %v406, %v727
  %729 = vmatmul.f32.gmra.mxu0 %v505
  %v730 = vpop.f32.mrf.mxu0
  %v731 = vadd.f32 %v409, %v730
  %732 = vmatmul.f32.gmra.mxu0 %v508
  %v733 = vpop.f32.mrf.mxu0
  %v734 = vadd.f32 %v412, %v733
  %735 = vmatmul.f32.gmra.mxu0 %v511
  %v736 = vpop.f32.mrf.mxu0
  %v737 = vadd.f32 %v415, %v736
  %738 = vmatmul.f32.gmra.mxu0 %v514
  %v739 = vpop.f32.mrf.mxu0
  %v740 = vadd.f32 %v418, %v739
  %741 = vmatmul.f32.gmra.mxu0 %v517
  %v742 = vpop.f32.mrf.mxu0
  %v743 = vadd.f32 %v421, %v742
  %744 = vmatmul.f32.gmra.mxu0 %v520
  %v745 = vpop.f32.mrf.mxu0
  %v746 = vadd.f32 %v424, %v745
  %747 = vmatmul.f32.gmra.mxu0 %v523
  %v748 = vpop.f32.mrf.mxu0
  %v749 = vadd.f32 %v427, %v748
  %750 = vdwg.mxu0
  %v751 = vld [vmem:[%s4] sm:$0x3]
  %v753 = vperm.slane %v751, 0
  %v754 = vperm.slane %v751, 1
  %v757 = vadd.f32 %v543, %v753
  %v758 = vadd.f32 %v656, %v754
  %v759 = vadd.f32 %v546, %v753
  %v760 = vadd.f32 %v659, %v754
  %v761 = vadd.f32 %v549, %v753
  %v762 = vadd.f32 %v662, %v754
  %v763 = vadd.f32 %v552, %v753
  %v764 = vadd.f32 %v665, %v754
  %v765 = vadd.f32 %v555, %v753
  %v766 = vadd.f32 %v668, %v754
  %v767 = vadd.f32 %v558, %v753
  %v768 = vadd.f32 %v671, %v754
  %v769 = vadd.f32 %v561, %v753
  %v770 = vadd.f32 %v674, %v754
  %v771 = vadd.f32 %v564, %v753
  %v772 = vadd.f32 %v677, %v754
  %v773 = vadd.f32 %v567, %v753
  %v774 = vadd.f32 %v680, %v754
  %v775 = vadd.f32 %v570, %v753
  %v776 = vadd.f32 %v683, %v754
  %v777 = vadd.f32 %v573, %v753
  %v778 = vadd.f32 %v686, %v754
  %v779 = vadd.f32 %v576, %v753
  %v780 = vadd.f32 %v689, %v754
  %v781 = vadd.f32 %v579, %v753
  %v782 = vadd.f32 %v692, %v754
  %v783 = vadd.f32 %v582, %v753
  %v784 = vadd.f32 %v695, %v754
  %v785 = vadd.f32 %v585, %v753
  %v786 = vadd.f32 %v698, %v754
  %v787 = vadd.f32 %v588, %v753
  %v788 = vadd.f32 %v701, %v754
  %v789 = vadd.f32 %v591, %v753
  %v790 = vadd.f32 %v704, %v754
  %v791 = vadd.f32 %v594, %v753
  %v792 = vadd.f32 %v707, %v754
  %v793 = vadd.f32 %v597, %v753
  %v794 = vadd.f32 %v710, %v754
  %v795 = vadd.f32 %v600, %v753
  %v796 = vadd.f32 %v713, %v754
  %v797 = vadd.f32 %v603, %v753
  %v798 = vadd.f32 %v716, %v754
  %v799 = vadd.f32 %v606, %v753
  %v800 = vadd.f32 %v719, %v754
  %v801 = vadd.f32 %v609, %v753
  %v802 = vadd.f32 %v722, %v754
  %v803 = vadd.f32 %v612, %v753
  %v804 = vadd.f32 %v725, %v754
  %v805 = vadd.f32 %v615, %v753
  %v806 = vadd.f32 %v728, %v754
  %v807 = vadd.f32 %v618, %v753
  %v808 = vadd.f32 %v731, %v754
  %v809 = vadd.f32 %v621, %v753
  %v810 = vadd.f32 %v734, %v754
  %v811 = vadd.f32 %v624, %v753
  %v812 = vadd.f32 %v737, %v754
  %v813 = vadd.f32 %v627, %v753
  %v814 = vadd.f32 %v740, %v754
  %v815 = vadd.f32 %v630, %v753
  %v816 = vadd.f32 %v743, %v754
  %v817 = vadd.f32 %v633, %v753
  %v818 = vadd.f32 %v746, %v754
  %v819 = vadd.f32 %v636, %v753
  %v820 = vadd.f32 %v749, %v754
  %v821 = vtanh.pop %v757
  %v822 = vtanh.pop %v758
  %v823 = vtanh.pop %v759
  %v824 = vtanh.pop %v760
  %v825 = vtanh.pop %v761
  %v826 = vtanh.pop %v762
  %v827 = vtanh.pop %v763
  %v828 = vtanh.pop %v764
  %v829 = vtanh.pop %v765
  %v830 = vtanh.pop %v766
  %v831 = vtanh.pop %v767
  %v832 = vtanh.pop %v768
  %v833 = vtanh.pop %v769
  %v834 = vtanh.pop %v770
  %v835 = vtanh.pop %v771
  %v836 = vtanh.pop %v772
  %v837 = vtanh.pop %v773
  %v838 = vtanh.pop %v774
  %v839 = vtanh.pop %v775
  %v840 = vtanh.pop %v776
  %v841 = vtanh.pop %v777
  %v842 = vtanh.pop %v778
  %v843 = vtanh.pop %v779
  %v844 = vtanh.pop %v780
  %v845 = vtanh.pop %v781
  %v846 = vtanh.pop %v782
  %v847 = vtanh.pop %v783
  %v848 = vtanh.pop %v784
  %v849 = vtanh.pop %v785
  %v850 = vtanh.pop %v786
  %v851 = vtanh.pop %v787
  %v852 = vtanh.pop %v788
  %v853 = vtanh.pop %v789
  %v854 = vtanh.pop %v790
  %v855 = vtanh.pop %v791
  %v856 = vtanh.pop %v792
  %v857 = vtanh.pop %v793
  %v858 = vtanh.pop %v794
  %v859 = vtanh.pop %v795
  %v860 = vtanh.pop %v796
  %v861 = vtanh.pop %v797
  %v862 = vtanh.pop %v798
  %v863 = vtanh.pop %v799
  %v864 = vtanh.pop %v800
  %v865 = vtanh.pop %v801
  %v866 = vtanh.pop %v802
  %v867 = vtanh.pop %v803
  %v868 = vtanh.pop %v804
  %v869 = vtanh.pop %v805
  %v870 = vtanh.pop %v806
  %v871 = vtanh.pop %v807
  %v872 = vtanh.pop %v808
  %v873 = vtanh.pop %v809
  %v874 = vtanh.pop %v810
  %v875 = vtanh.pop %v811
  %v876 = vtanh.pop %v812
  %v877 = vtanh.pop %v813
  %v878 = vtanh.pop %v814
  %v879 = vtanh.pop %v815
  %v880 = vtanh.pop %v816
  %v881 = vtanh.pop %v817
  %v882 = vtanh.pop %v818
  %v883 = vtanh.pop %v819
  %v884 = vtanh.pop %v820
  %v885 = vld [vmem:[%s5] sm:$0xff]
  %v886 = vld [vmem:[%s5 + $0x8] sm:$0xff]
  %v887 = vld [vmem:[%s5 + $0x10] sm:$0xff]
  %v888 = vld [vmem:[%s5 + $0x18] sm:$0xff]
  %v889 = vld [vmem:[%s5 + $0x20] sm:$0xff]
  %v890 = vld [vmem:[%s5 + $0x28] sm:$0xff]
  %v891 = vld [vmem:[%s5 + $0x30] sm:$0xff]
  %v892 = vld [vmem:[%s5 + $0x38] sm:$0xff]
  %v893 = vld [vmem:[%s5 + $0x40] sm:$0xff]
  %v894 = vld [vmem:[%s5 + $0x48] sm:$0xff]
  %v895 = vld [vmem:[%s5 + $0x50] sm:$0xff]
  %v896 = vld [vmem:[%s5 + $0x58] sm:$0xff]
  %v897 = vld [vmem:[%s5 + $0x60] sm:$0xff]
  %v898 = vld [vmem:[%s5 + $0x68] sm:$0xff]
  %v899 = vld [vmem:[%s5 + $0x70] sm:$0xff]
  %v900 = vld [vmem:[%s5 + $0x78] sm:$0xff]
  %v901 = vld [vmem:[%s5 + $0x80] sm:$0xff]
  %v902 = vld [vmem:[%s5 + $0x88] sm:$0xff]
  %v903 = vld [vmem:[%s5 + $0x90] sm:$0xff]
  %v904 = vld [vmem:[%s5 + $0x98] sm:$0xff]
  %v905 = vld [vmem:[%s5 + $0xa0] sm:$0xff]
  %v906 = vld [vmem:[%s5 + $0xa8] sm:$0xff]
  %v907 = vld [vmem:[%s5 + $0xb0] sm:$0xff]
  %v908 = vld [vmem:[%s5 + $0xb8] sm:$0xff]
  %v909 = vld [vmem:[%s5 + $0xc0] sm:$0xff]
  %v910 = vld [vmem:[%s5 + $0xc8] sm:$0xff]
  %v911 = vld [vmem:[%s5 + $0xd0] sm:$0xff]
  %v912 = vld [vmem:[%s5 + $0xd8] sm:$0xff]
  %v913 = vld [vmem:[%s5 + $0xe0] sm:$0xff]
  %v914 = vld [vmem:[%s5 + $0xe8] sm:$0xff]
  %v915 = vld [vmem:[%s5 + $0xf0] sm:$0xff]
  %v916 = vld [vmem:[%s5 + $0xf8] sm:$0xff]
  %v917 = vld [vmem:[%s6] sm:$0x1]
  %v919 = vperm.slane %v917, 0
  %921 = vmatpush.msra.mxu0 %v900
  %922 = vmatpush.msra.mxu0 %v899
  %923 = vmatpush.msra.mxu0 %v898
  %924 = vmatpush.msra.mxu0 %v897
  %925 = vmatpush.msra.mxu0 %v896
  %926 = vmatpush.msra.mxu0 %v895
  %927 = vmatpush.msra.mxu0 %v894
  %928 = vmatpush.msra.mxu0 %v893
  %929 = vmatpush.msra.mxu0 %v892
  %930 = vmatpush.msra.mxu0 %v891
  %931 = vmatpush.msra.mxu0 %v890
  %932 = vmatpush.msra.mxu0 %v889
  %933 = vmatpush.msra.mxu0 %v888
  %934 = vmatpush.msra.mxu0 %v887
  %935 = vmatpush.msra.mxu0 %v886
  %936 = vmatpush.msra.mxu0 %v885
  %937 = vmatmul.f32.gmra.mxu0 %v821
  %v938 = vpop.f32.mrf.mxu0
  %v939 = vadd.f32 %v919, %v938
  %940 = vmatmul.f32.gmra.mxu0 %v823
  %v941 = vpop.f32.mrf.mxu0
  %v942 = vadd.f32 %v919, %v941
  %943 = vmatmul.f32.gmra.mxu0 %v825
  %v944 = vpop.f32.mrf.mxu0
  %v945 = vadd.f32 %v919, %v944
  %946 = vmatmul.f32.gmra.mxu0 %v827
  %v947 = vpop.f32.mrf.mxu0
  %v948 = vadd.f32 %v919, %v947
  %949 = vmatmul.f32.gmra.mxu0 %v829
  %v950 = vpop.f32.mrf.mxu0
  %v951 = vadd.f32 %v919, %v950
  %952 = vmatmul.f32.gmra.mxu0 %v831
  %v953 = vpop.f32.mrf.mxu0
  %v954 = vadd.f32 %v919, %v953
  %955 = vmatmul.f32.gmra.mxu0 %v833
  %v956 = vpop.f32.mrf.mxu0
  %v957 = vadd.f32 %v919, %v956
  %958 = vmatmul.f32.gmra.mxu0 %v835
  %v959 = vpop.f32.mrf.mxu0
  %v960 = vadd.f32 %v919, %v959
  %961 = vmatmul.f32.gmra.mxu0 %v837
  %v962 = vpop.f32.mrf.mxu0
  %v963 = vadd.f32 %v919, %v962
  %964 = vmatmul.f32.gmra.mxu0 %v839
  %v965 = vpop.f32.mrf.mxu0
  %v966 = vadd.f32 %v919, %v965
  %967 = vmatmul.f32.gmra.mxu0 %v841
  %v968 = vpop.f32.mrf.mxu0
  %v969 = vadd.f32 %v919, %v968
  %970 = vmatmul.f32.gmra.mxu0 %v843
  %v971 = vpop.f32.mrf.mxu0
  %v972 = vadd.f32 %v919, %v971
  %973 = vmatmul.f32.gmra.mxu0 %v845
  %v974 = vpop.f32.mrf.mxu0
  %v975 = vadd.f32 %v919, %v974
  %976 = vmatmul.f32.gmra.mxu0 %v847
  %v977 = vpop.f32.mrf.mxu0
  %v978 = vadd.f32 %v919, %v977
  %979 = vmatmul.f32.gmra.mxu0 %v849
  %v980 = vpop.f32.mrf.mxu0
  %v981 = vadd.f32 %v919, %v980
  %982 = vmatmul.f32.gmra.mxu0 %v851
  %v983 = vpop.f32.mrf.mxu0
  %v984 = vadd.f32 %v919, %v983
  %985 = vmatmul.f32.gmra.mxu0 %v853
  %v986 = vpop.f32.mrf.mxu0
  %v987 = vadd.f32 %v919, %v986
  %988 = vmatmul.f32.gmra.mxu0 %v855
  %v989 = vpop.f32.mrf.mxu0
  %v990 = vadd.f32 %v919, %v989
  %991 = vmatmul.f32.gmra.mxu0 %v857
  %v992 = vpop.f32.mrf.mxu0
  %v993 = vadd.f32 %v919, %v992
  %994 = vmatmul.f32.gmra.mxu0 %v859
  %v995 = vpop.f32.mrf.mxu0
  %v996 = vadd.f32 %v919, %v995
  %997 = vmatmul.f32.gmra.mxu0 %v861
  %v998 = vpop.f32.mrf.mxu0
  %v999 = vadd.f32 %v919, %v998
  %1000 = vmatmul.f32.gmra.mxu0 %v863
  %v1001 = vpop.f32.mrf.mxu0
  %v1002 = vadd.f32 %v919, %v1001
  %1003 = vmatmul.f32.gmra.mxu0 %v865
  %v1004 = vpop.f32.mrf.mxu0
  %v1005 = vadd.f32 %v919, %v1004
  %1006 = vmatmul.f32.gmra.mxu0 %v867
  %v1007 = vpop.f32.mrf.mxu0
  %v1008 = vadd.f32 %v919, %v1007
  %1009 = vmatmul.f32.gmra.mxu0 %v869
  %v1010 = vpop.f32.mrf.mxu0
  %v1011 = vadd.f32 %v919, %v1010
  %1012 = vmatmul.f32.gmra.mxu0 %v871
  %v1013 = vpop.f32.mrf.mxu0
  %v1014 = vadd.f32 %v919, %v1013
  %1015 = vmatmul.f32.gmra.mxu0 %v873
  %v1016 = vpop.f32.mrf.mxu0
  %v1017 = vadd.f32 %v919, %v1016
  %1018 = vmatmul.f32.gmra.mxu0 %v875
  %v1019 = vpop.f32.mrf.mxu0
  %v1020 = vadd.f32 %v919, %v1019
  %1021 = vmatmul.f32.gmra.mxu0 %v877
  %v1022 = vpop.f32.mrf.mxu0
  %v1023 = vadd.f32 %v919, %v1022
  %1024 = vmatmul.f32.gmra.mxu0 %v879
  %v1025 = vpop.f32.mrf.mxu0
  %v1026 = vadd.f32 %v919, %v1025
  %1027 = vmatmul.f32.gmra.mxu0 %v881
  %v1028 = vpop.f32.mrf.mxu0
  %v1029 = vadd.f32 %v919, %v1028
  %1030 = vmatmul.f32.gmra.mxu0 %v883
  %v1031 = vpop.f32.mrf.mxu0
  %v1032 = vadd.f32 %v919, %v1031
  %1033 = vdwg.mxu0
  %1034 = vmatpush.msra.mxu0 %v916
  %1035 = vmatpush.msra.mxu0 %v915
  %1036 = vmatpush.msra.mxu0 %v914
  %1037 = vmatpush.msra.mxu0 %v913
  %1038 = vmatpush.msra.mxu0 %v912
  %1039 = vmatpush.msra.mxu0 %v911
  %1040 = vmatpush.msra.mxu0 %v910
  %1041 = vmatpush.msra.mxu0 %v909
  %1042 = vmatpush.msra.mxu0 %v908
  %1043 = vmatpush.msra.mxu0 %v907
  %1044 = vmatpush.msra.mxu0 %v906
  %1045 = vmatpush.msra.mxu0 %v905
  %1046 = vmatpush.msra.mxu0 %v904
  %1047 = vmatpush.msra.mxu0 %v903
  %1048 = vmatpush.msra.mxu0 %v902
  %1049 = vmatpush.msra.mxu0 %v901
  %1050 = vmatmul.f32.gmra.mxu0 %v822
  %v1051 = vpop.f32.mrf.mxu0
  %v1052 = vadd.f32 %v939, %v1051
  %1053 = vmatmul.f32.gmra.mxu0 %v824
  %v1054 = vpop.f32.mrf.mxu0
  %v1055 = vadd.f32 %v942, %v1054
  %1056 = vmatmul.f32.gmra.mxu0 %v826
  %v1057 = vpop.f32.mrf.mxu0
  %v1058 = vadd.f32 %v945, %v1057
  %1059 = vmatmul.f32.gmra.mxu0 %v828
  %v1060 = vpop.f32.mrf.mxu0
  %v1061 = vadd.f32 %v948, %v1060
  %1062 = vmatmul.f32.gmra.mxu0 %v830
  %v1063 = vpop.f32.mrf.mxu0
  %v1064 = vadd.f32 %v951, %v1063
  %1065 = vmatmul.f32.gmra.mxu0 %v832
  %v1066 = vpop.f32.mrf.mxu0
  %v1067 = vadd.f32 %v954, %v1066
  %1068 = vmatmul.f32.gmra.mxu0 %v834
  %v1069 = vpop.f32.mrf.mxu0
  %v1070 = vadd.f32 %v957, %v1069
  %1071 = vmatmul.f32.gmra.mxu0 %v836
  %v1072 = vpop.f32.mrf.mxu0
  %v1073 = vadd.f32 %v960, %v1072
  %1074 = vmatmul.f32.gmra.mxu0 %v838
  %v1075 = vpop.f32.mrf.mxu0
  %v1076 = vadd.f32 %v963, %v1075
  %1077 = vmatmul.f32.gmra.mxu0 %v840
  %v1078 = vpop.f32.mrf.mxu0
  %v1079 = vadd.f32 %v966, %v1078
  %1080 = vmatmul.f32.gmra.mxu0 %v842
  %v1081 = vpop.f32.mrf.mxu0
  %v1082 = vadd.f32 %v969, %v1081
  %1083 = vmatmul.f32.gmra.mxu0 %v844
  %v1084 = vpop.f32.mrf.mxu0
  %v1085 = vadd.f32 %v972, %v1084
  %1086 = vmatmul.f32.gmra.mxu0 %v846
  %v1087 = vpop.f32.mrf.mxu0
  %v1088 = vadd.f32 %v975, %v1087
  %1089 = vmatmul.f32.gmra.mxu0 %v848
  %v1090 = vpop.f32.mrf.mxu0
  %v1091 = vadd.f32 %v978, %v1090
  %1092 = vmatmul.f32.gmra.mxu0 %v850
  %v1093 = vpop.f32.mrf.mxu0
  %v1094 = vadd.f32 %v981, %v1093
  %1095 = vmatmul.f32.gmra.mxu0 %v852
  %v1096 = vpop.f32.mrf.mxu0
  %v1097 = vadd.f32 %v984, %v1096
  %1098 = vmatmul.f32.gmra.mxu0 %v854
  %v1099 = vpop.f32.mrf.mxu0
  %v1100 = vadd.f32 %v987, %v1099
  %1101 = vmatmul.f32.gmra.mxu0 %v856
  %v1102 = vpop.f32.mrf.mxu0
  %v1103 = vadd.f32 %v990, %v1102
  %1104 = vmatmul.f32.gmra.mxu0 %v858
  %v1105 = vpop.f32.mrf.mxu0
  %v1106 = vadd.f32 %v993, %v1105
  %1107 = vmatmul.f32.gmra.mxu0 %v860
  %v1108 = vpop.f32.mrf.mxu0
  %v1109 = vadd.f32 %v996, %v1108
  %1110 = vmatmul.f32.gmra.mxu0 %v862
  %v1111 = vpop.f32.mrf.mxu0
  %v1112 = vadd.f32 %v999, %v1111
  %1113 = vmatmul.f32.gmra.mxu0 %v864
  %v1114 = vpop.f32.mrf.mxu0
  %v1115 = vadd.f32 %v1002, %v1114
  %1116 = vmatmul.f32.gmra.mxu0 %v866
  %v1117 = vpop.f32.mrf.mxu0
  %v1118 = vadd.f32 %v1005, %v1117
  %1119 = vmatmul.f32.gmra.mxu0 %v868
  %v1120 = vpop.f32.mrf.mxu0
  %v1121 = vadd.f32 %v1008, %v1120
  %1122 = vmatmul.f32.gmra.mxu0 %v870
  %v1123 = vpop.f32.mrf.mxu0
  %v1124 = vadd.f32 %v1011, %v1123
  %1125 = vmatmul.f32.gmra.mxu0 %v872
  %v1126 = vpop.f32.mrf.mxu0
  %v1127 = vadd.f32 %v1014, %v1126
  %1128 = vmatmul.f32.gmra.mxu0 %v874
  %v1129 = vpop.f32.mrf.mxu0
  %v1130 = vadd.f32 %v1017, %v1129
  %1131 = vmatmul.f32.gmra.mxu0 %v876
  %v1132 = vpop.f32.mrf.mxu0
  %v1133 = vadd.f32 %v1020, %v1132
  %1134 = vmatmul.f32.gmra.mxu0 %v878
  %v1135 = vpop.f32.mrf.mxu0
  %v1136 = vadd.f32 %v1023, %v1135
  %1137 = vmatmul.f32.gmra.mxu0 %v880
  %v1138 = vpop.f32.mrf.mxu0
  %v1139 = vadd.f32 %v1026, %v1138
  %1140 = vmatmul.f32.gmra.mxu0 %v882
  %v1141 = vpop.f32.mrf.mxu0
  %v1142 = vadd.f32 %v1029, %v1141
  %1143 = vmatmul.f32.gmra.mxu0 %v884
  %v1144 = vpop.f32.mrf.mxu0
  %v1145 = vadd.f32 %v1032, %v1144
  %1146 = vdwg.mxu0
  %1147 = vst [vmem:[%s7] sm:$0xff] %v1052
  %1148 = vst [vmem:[%s7 + $0x8] sm:$0xff] %v1055
  %1149 = vst [vmem:[%s7 + $0x10] sm:$0xff] %v1058
  %1150 = vst [vmem:[%s7 + $0x18] sm:$0xff] %v1061
  %1151 = vst [vmem:[%s7 + $0x20] sm:$0xff] %v1064
  %1152 = vst [vmem:[%s7 + $0x28] sm:$0xff] %v1067
  %1153 = vst [vmem:[%s7 + $0x30] sm:$0xff] %v1070
  %1154 = vst [vmem:[%s7 + $0x38] sm:$0xff] %v1073
  %1155 = vst [vmem:[%s7 + $0x40] sm:$0xff] %v1076
  %1156 = vst [vmem:[%s7 + $0x48] sm:$0xff] %v1079
  %1157 = vst [vmem:[%s7 + $0x50] sm:$0xff] %v1082
  %1158 = vst [vmem:[%s7 + $0x58] sm:$0xff] %v1085
  %1159 = vst [vmem:[%s7 + $0x60] sm:$0xff] %v1088
  %1160 = vst [vmem:[%s7 + $0x68] sm:$0xff] %v1091
  %1161 = vst [vmem:[%s7 + $0x70] sm:$0xff] %v1094
  %1162 = vst [vmem:[%s7 + $0x78] sm:$0xff] %v1097
  %1163 = vst [vmem:[%s7 + $0x80] sm:$0xff] %v1100
  %1164 = vst [vmem:[%s7 + $0x88] sm:$0xff] %v1103
  %1165 = vst [vmem:[%s7 + $0x90] sm:$0xff] %v1106
  %1166 = vst [vmem:[%s7 + $0x98] sm:$0xff] %v1109
  %1167 = vst [vmem:[%s7 + $0xa0] sm:$0xff] %v1112
  %1168 = vst [vmem:[%s7 + $0xa8] sm:$0xff] %v1115
  %1169 = vst [vmem:[%s7 + $0xb0] sm:$0xff] %v1118
  %1170 = vst [vmem:[%s7 + $0xb8] sm:$0xff] %v1121
  %1171 = vst [vmem:[%s7 + $0xc0] sm:$0xff] %v1124
  %1172 = vst [vmem:[%s7 + $0xc8] sm:$0xff] %v1127
  %1173 = vst [vmem:[%s7 + $0xd0] sm:$0xff] %v1130
  %1174 = vst [vmem:[%s7 + $0xd8] sm:$0xff] %v1133
  %1175 = vst [vmem:[%s7 + $0xe0] sm:$0xff] %v1136
  %1176 = vst [vmem:[%s7 + $0xe8] sm:$0xff] %v1139
  %1177 = vst [vmem:[%s7 + $0xf0] sm:$0xff] %v1142
  %1178 = vst [vmem:[%s7 + $0xf8] sm:$0xff] %v1145
  // Predicated region
  $region30: #{mlp_forward.1} parent=0 // pred_check
    _
  $region31: #{mlp_forward.1} parent=0 // pred_check_branch
    %1180 = sbr.rel (0) target = $region33
  $region32: #{mlp_forward.1} parent=0 // pred_region
    _
  $region33: #{mlp_forward.1} parent=0 // pred_fallthru
    _
  // Predicated region
  $region34: #{mlp_forward.1} parent=0 // pred_check
    _
  $region35: #{mlp_forward.1} parent=0 // pred_check_branch
    %1182 = sbr.rel (0) target = $region37
  $region36: #{mlp_forward.1} parent=0 // pred_region
    _
  $region37: #{mlp_forward.1} parent=0 // pred_fallthru
    _

</llo_original>
